<compile_context>
chip_gen: v7x
topology: tpu7x:2x2x1
jax: 0.10.0
libtpu: 0.0.40
codegen_flags: <defaults>
</compile_context>

<pallas_src>
import jax
import jax.numpy as jnp
from jax import lax
from jax.experimental import pallas as pl
from jax.experimental.pallas import tpu as pltpu


def _round_up(a, b):
    return pl.cdiv(a, b) * b


def _gemv_kernel(x_ref, w_ref, b_ref, o_ref):
    # x_ref: [rows, D] (x.dtype), w_ref: [1, D] (x.dtype), b_ref: [1, 1] f32,
    # o_ref: [1, rows] f32.
    # 'nt' contraction (contract last dims of both operands): the result
    # arrives directly as a lane-dense row [1, rows] == (x @ w^T)^T, so stores
    # are full-lane vst, not masked [rows, 1] column stores.
    # TODO(synk): verify with pl.lower_as_mlir that Mosaic does not emit an
    # explicit vxpose of the x tile to feed the MXU; if it shows on the
    # steady-state critical path, switch to x @ w_col and relayout only the
    # tiny [rows, 1] result.
    s = lax.dot_general(
        w_ref[...], x_ref[...],
        dimension_numbers=(((1,), (1,)), ((), ())),
        preferred_element_type=jnp.float32,
    )
    o_ref[...] = (s + b_ref[...]).astype(o_ref.dtype)


def user_adapting_modulator2(x, params, *, tile_m=8192):
    """Forward pass of UserAdaptingModulator2.

    x:      [N, emb_all_dims] float (f32 or bf16; kept in its own dtype)
    params: PyTorch-convention weights:
            'predictor_layer_1.weight' [d0, D], 'predictor_layer_1.bias' [d0]
            'predictor_layer_2.weight' [d1, d0], 'predictor_layer_2.bias' [d1]
            'predictor_layer_3.weight' [1,  d1], 'predictor_layer_3.bias' [1]
    returns [N, 1] float32
    """
    N, D = x.shape
    f32 = jnp.float32
    w1 = jnp.asarray(params["predictor_layer_1.weight"], f32)  # [d0, D]
    b1 = jnp.asarray(params["predictor_layer_1.bias"], f32)    # [d0]
    w2 = jnp.asarray(params["predictor_layer_2.weight"], f32)  # [d1, d0]
    b2 = jnp.asarray(params["predictor_layer_2.bias"], f32)    # [d1]
    w3 = jnp.asarray(params["predictor_layer_3.weight"], f32)  # [1, d1]
    b3 = jnp.asarray(params["predictor_layer_3.bias"], f32)    # [1]

    # Fold the purely-linear 3-layer MLP into one affine map (done once, f32).
    # Weight row is cast to x.dtype so the MXU operands match x's precision;
    # accumulation stays f32 inside the kernel.
    w_row = (w3 @ w2 @ w1).astype(x.dtype)              # [1, D] == W_eff^T
    b_eff = (w3 @ (w2 @ b1 + b2) + b3).reshape(1, 1)    # [1, 1] f32

    # Row tiling.  x is NEVER copied or padded:
    #  * N <= tile_m: one block whose row count is exactly N (full-dim block).
    #  * N  > tile_m: tile_m-row blocks (128-multiple -> lane-dense output);
    #    the last block reads past the end of x (unspecified rows) but those
    #    only land in output lanes discarded by the [:N] slice below.
    tile_m = max(128, (int(tile_m) // 128) * 128)
    if N <= tile_m:
        rows, n_blocks = N, 1
    else:
        rows, n_blocks = tile_m, pl.cdiv(N, tile_m)
    n_out = rows * n_blocks

    # VMEM accounting against the lane-padded block (D=72 pads to 128 lanes,
    # i.e. rows * 512 B per f32 buffer); only raise the scoped limit when a
    # large user-supplied tile actually needs it.
    lane_d = _round_up(D, 128)
    itemsize = jnp.dtype(x.dtype).itemsize
    vmem_est = (2 * rows * lane_d * itemsize        # x double buffer
                + 2 * rows * 4                      # output double buffer
                + 2 * lane_d * itemsize + 4096)     # weight row + bias
    vmem_limit = (int(vmem_est * 1.5) + (2 << 20)) if vmem_est > (12 << 20) else None

    out_row = pl.pallas_call(
        _gemv_kernel,
        out_shape=jax.ShapeDtypeStruct((1, n_out), f32),
        grid=(n_blocks,),
        in_specs=[
            pl.BlockSpec((rows, D), lambda i: (i, 0)),   # x row tile (streamed)
            pl.BlockSpec((1, D), lambda i: (0, 0)),      # folded weight row
            pl.BlockSpec((1, 1), lambda i: (0, 0)),      # folded bias
        ],
        out_specs=pl.BlockSpec((1, rows), lambda i: (0, i)),  # lane-dense row block
        compiler_params=pltpu.CompilerParams(
            # TODO(synk): on v7x mark this axis CORE_PARALLEL (or use
            # pl.core_map over a 2-core tensorcore mesh) to engage both
            # TensorCores' HBM paths; kept "parallel" for single-TC portability.
            dimension_semantics=("parallel",),
            vmem_limit_bytes=vmem_limit,
        ),
    )(x, w_row, b_eff)

    # TODO(synk): if the producer of x is controllable, emit a 128-multiple
    # feature dim (72 lane-pads to 128 -> ~1.78x extra HBM traffic) or fuse
    # this GEMV into the producing kernel.
    return out_row[0, :N].reshape(N, 1)


def _init_params(key, emb_all_dims, encoder_layer_dims):
    """Deterministic synthetic parameter init (PyTorch Linear shapes)."""
    d0, d1 = encoder_layer_dims
    ks = jax.random.split(key, 6)
    scale = 0.02
    return {
        "predictor_layer_1.weight": scale * jax.random.normal(ks[0], (d0, emb_all_dims), jnp.float32),
        "predictor_layer_1.bias":   scale * jax.random.normal(ks[1], (d0,), jnp.float32),
        "predictor_layer_2.weight": scale * jax.random.normal(ks[2], (d1, d0), jnp.float32),
        "predictor_layer_2.bias":   scale * jax.random.normal(ks[3], (d1,), jnp.float32),
        "predictor_layer_3.weight": scale * jax.random.normal(ks[4], (1, d1), jnp.float32),
        "predictor_layer_3.bias":   scale * jax.random.normal(ks[5], (1,), jnp.float32),
    }


def _reference(x, params):
    h = x @ params["predictor_layer_1.weight"].T + params["predictor_layer_1.bias"]
    h = h @ params["predictor_layer_2.weight"].T + params["predictor_layer_2.bias"]
    return h @ params["predictor_layer_3.weight"].T + params["predictor_layer_3.bias"]


if __name__ == "__main__":
    EMB = 72                 # feature_num * embedding_size
    ENC_DIMS = [64, 32]      # config['encoder_layer_dim']

    key = jax.random.PRNGKey(0)
    kx, kp, kx2 = jax.random.split(key, 3)
    params = _init_params(kp, EMB, ENC_DIMS)

    # Tiny batch (inter_num=16): single full-dim block, no padding anywhere.
    x = jax.random.normal(kx, (16, EMB), jnp.float32)
    out = jax.block_until_ready(user_adapting_modulator2(x, params))
    ref = _reference(x, params)
    assert out.shape == (16, 1)
    assert jnp.allclose(out, ref, atol=1e-4, rtol=1e-4), (
        f"max abs err {jnp.max(jnp.abs(out - ref))}")

    # Non-divisible batch, default tile (single block covering all 300 rows).
    x2 = jax.random.normal(kx2, (300, EMB), jnp.float32)
    ref2 = _reference(x2, params)
    out2 = jax.block_until_ready(user_adapting_modulator2(x2, params))
    assert out2.shape == (300, 1)
    assert jnp.allclose(out2, ref2, atol=1e-4, rtol=1e-4), (
        f"max abs err {jnp.max(jnp.abs(out2 - ref2))}")

    # Same batch forced onto a multi-step grid with a partial last block
    # (exercises the no-pad tail path: OOB rows land only in sliced-off lanes).
    out3 = jax.block_until_ready(user_adapting_modulator2(x2, params, tile_m=128))
    assert out3.shape == (300, 1)
    assert jnp.allclose(out3, ref2, atol=1e-4, rtol=1e-4), (
        f"max abs err {jnp.max(jnp.abs(out3 - ref2))}")

    # bf16 input path: x stays bf16 end-to-end (half the HBM read), f32 accum.
    x2_bf = x2.astype(jnp.bfloat16)
    out4 = jax.block_until_ready(user_adapting_modulator2(x2_bf, params, tile_m=128))
    ref4 = _reference(x2_bf.astype(jnp.float32), params)
    assert out4.shape == (300, 1)
    assert jnp.allclose(out4, ref4, atol=5e-3, rtol=5e-3), (
        f"max abs err {jnp.max(jnp.abs(out4 - ref4))}")

    print("KERNEL_OK")
</pallas_src>

<mosaic_0001>
module attributes {stable_mosaic.version = 11 : i64} {
  func.func @_gemv_kernel(%arg0: i32, %arg1: memref<16x72xf32, #tpu.memory_space<vmem>>, %arg2: memref<1x72xf32, #tpu.memory_space<vmem>>, %arg3: memref<1x1xf32, #tpu.memory_space<vmem>>, %arg4: memref<1x16xf32, #tpu.memory_space<vmem>>) attributes {dimension_semantics = [#tpu.dimension_semantics<parallel>], iteration_bounds = array<i64: 1>, scalar_prefetch = 0 : i64, scratch_operands = 0 : i64, tpu.core_type = #tpu.core_type<tc>, window_params = [{transform_indices = @transform_0, window_bounds = array<i64: 16, 72>}, {pipeline_mode = #tpu.pipeline_mode<synchronous>, transform_indices = @transform_1, window_bounds = array<i64: 1, 72>}, {pipeline_mode = #tpu.pipeline_mode<synchronous>, transform_indices = @transform_2, window_bounds = array<i64: 1, 1>}, {transform_indices = @transform_3, window_bounds = array<i64: 1, 16>}]} {
    %c0 = arith.constant 0 : index
    %c0_0 = arith.constant 0 : index
    %0 = vector.load %arg2[%c0, %c0_0] : memref<1x72xf32, #tpu.memory_space<vmem>>, vector<1x72xf32>
    %c0_1 = arith.constant 0 : index
    %c0_2 = arith.constant 0 : index
    %1 = vector.load %arg1[%c0_1, %c0_2] : memref<16x72xf32, #tpu.memory_space<vmem>>, vector<16x72xf32>
    %cst = arith.constant dense<0.000000e+00> : vector<1x16xf32>
    %2 = tpu.matmul %0, %1, %cst {dimension_numbers = #tpu.dot_dimension_numbers<[1], [1], [0], [0], [0, 0, 1, 0], [], []>} : vector<1x72xf32>, vector<16x72xf32>, vector<1x16xf32> -> vector<1x16xf32>
    %c0_3 = arith.constant 0 : index
    %c0_4 = arith.constant 0 : index
    %3 = vector.load %arg3[%c0_3, %c0_4] : memref<1x1xf32, #tpu.memory_space<vmem>>, vector<1x1xf32>
    %4 = vector.broadcast %3 : vector<1x1xf32> to vector<1x16xf32>
    %5 = arith.addf %2, %4 : vector<1x16xf32>
    %c0_5 = arith.constant 0 : index
    %c0_6 = arith.constant 0 : index
    %6 = vector.load %arg4[%c0_5, %c0_6] : memref<1x16xf32, #tpu.memory_space<vmem>>, vector<1x16xf32>
    tpu.vector_store %arg4[%c0_5, %c0_6], %5 {strides = array<i32>} : memref<1x16xf32, #tpu.memory_space<vmem>>, vector<1x16xf32>,
    return
  }
  func.func @transform_0(%arg0: i32) -> (i32, i32) {
    %c0_i32 = arith.constant 0 : i32
    %c0_i32_0 = arith.constant 0 : i32
    return %arg0, %c0_i32 : i32, i32
  }
  func.func @transform_1(%arg0: i32) -> (i32, i32) {
    %c0_i32 = arith.constant 0 : i32
    %c0_i32_0 = arith.constant 0 : i32
    %c0_i32_1 = arith.constant 0 : i32
    return %c0_i32, %c0_i32_0 : i32, i32
  }
  func.func @transform_2(%arg0: i32) -> (i32, i32) {
    %c0_i32 = arith.constant 0 : i32
    %c0_i32_0 = arith.constant 0 : i32
    %c0_i32_1 = arith.constant 0 : i32
    return %c0_i32, %c0_i32_0 : i32, i32
  }
  func.func @transform_3(%arg0: i32) -> (i32, i32) {
    %c0_i32 = arith.constant 0 : i32
    %c0_i32_0 = arith.constant 0 : i32
    return %c0_i32, %arg0 : i32, i32
  }
}

</mosaic_0001>

<llo_original>
// kernel: tpu_custom_call.1
$region0: #{tpu_custom_call.1}
  #allocation0 [shape = 'u32[]', space=smem, size = 0x4, offset = 0x4, fixed_abs, tag = 'smem constant byte address 0x4 - core index']
  #allocation1 [shape = 'u32[144,128]{1,0:T(1,128)}', space=vmem, size = 0x12000, scoped, tag = 'internal scratch']
  #allocation2 [shape = 'f32[1,1]{1,0:T(1,128)S(1)}', space=vmem, size = 0x200, scoped, tag = 'scoped memory for tpu_custom_call.1']
  %s0 = inlined_call_operand.hbm [shape: f32[16,72], index: 0, kind: input, shape index: {}]
  %s1 = inlined_call_operand.vmem [shape: f32[1,72], index: 1, kind: input, shape index: {}]
  %s2 = inlined_call_operand.<no memory space> [shape: f32[1,1], index: 2, kind: input, shape index: {}]
  %s3 = inlined_call_operand.hbm [shape: f32[1,16], index: 3, kind: output, shape index: {}]
  %s4 = sld [smem:[#allocation0]]
  $region26: #{tpu_custom_call.1} parent=0
    _
  %s6 = ssub.s32 1, %s4
  %s7 = scalar_select 0, %s6, %s4
  %v8 = vstv %s2
  %9 = vst [vmem:[#allocation2] sm:$0x1] %v8
  $region1: #{tpu_custom_call.1} parent=0
    #allocation3 [shape = 'u8[8192]{0}', space=vmem, size = 0x2000, scoped, tag = 'input window, operand 0, single buffered']
    #allocation4 [shape = 's32[1]{0}', space=sflag, size = 0x4, scoped, tag = 'scoped memory for tpu_custom_call.1']
    #allocation5 [shape = 's32[1]{0}', space=sflag, size = 0x4, scoped, tag = 'scoped memory for tpu_custom_call.1']
    #allocation6 [shape = 'u8[512]{0}', space=vmem, size = 0x400, scoped, tag = 'output window, operand 0, single buffered']
    %10 = vsyncpa [#allocation4], 0
    %11 = vsyncpa [#allocation5], 0
    // Predicated region
    $region2: #{tpu_custom_call.1} parent=1 // pred_check
      _
    $region3: #{tpu_custom_call.1} parent=1 // pred_check_branch
      %13 = sbr.rel (0) target = $region5
    $region4: #{tpu_custom_call.1} parent=1 // pred_region
      %s15 = ssub.s32 256, 256
      %16 = vsyncadd [#allocation4], %s15
      %s17 = sshll.u32 [#allocation3], 4
      %s18 = int_to_ptr.vmem [resolvable:$true] %s17
      %23 = dma.hbm_to_vmem [thread:$0]  %s0, 256, %s18, [#allocation4], 128, 128, 8
    $region5: #{tpu_custom_call.1} parent=1 // pred_fallthru
      _
    // Predicated region
    $region6: #{tpu_custom_call.1} parent=1 // pred_check
      _
    $region7: #{tpu_custom_call.1} parent=1 // pred_check_branch
      %25 = sbr.rel (0) target = $region9
    $region8: #{tpu_custom_call.1} parent=1 // pred_region
      _
    $region9: #{tpu_custom_call.1} parent=1 // pred_fallthru
      _
    // Predicated region
    $region10: #{tpu_custom_call.1} parent=1 // pred_check
      _
    $region11: #{tpu_custom_call.1} parent=1 // pred_check_branch
      %27 = sbr.rel (0) target = $region13
    $region12: #{tpu_custom_call.1} parent=1 // pred_region
      _
    $region13: #{tpu_custom_call.1} parent=1 // pred_fallthru
      _
    // Predicated region
    $region14: #{tpu_custom_call.1} parent=1 // pred_check
      _
    $region15: #{tpu_custom_call.1} parent=1 // pred_check_branch
      %29 = sbr.rel (0) target = $region17
    $region16: #{tpu_custom_call.1} parent=1 // pred_region
      %30 = dma.done [#allocation4], 256
    $region17: #{tpu_custom_call.1} parent=1 // pred_fallthru
      _
    %v31 = vld [vmem:[%s1] sm:$0x1]
    %v32 = vld [vmem:[#allocation3] sm:$0xff]
    %v33 = vld [vmem:[#allocation3 + $0x8] sm:$0xff]
    %v34 = vld [vmem:[#allocation2] sm:$0x1]
    %36 = vset.pattern.permute.xlu0 0
    %37 = vperm.xlu0 %36, %v34
    %v38 = vpop.permute.xlu0 %37
    %v40 = vlaneseq
    %v41 = vshrl.u32 %v40, 7
    %v42 = vsub.s32 0, %v41
    %v43 = vrot.slane %v38, %v42
    %vm44 = vcmask 588800
    %v46 = vsel %vm44, %v31, 0
    %v49 = vsel %vm44, %v32, 0
    %v52 = vsel %vm44, %v33, 0
    %54 = vmatprep.subr.mxu0 0.0
    %55 = vmatpush1.xpose.msra.mxu0 %v49
    %56 = vmatprep.subr.mxu0 0.0
    %57 = vmatpush1.xpose.msra.mxu0 %v52
    %58 = vmatprep.subr.mxu0 0.0
    %59 = vmatpush1.xpose.msra.mxu0 0.0
    %60 = vmatprep.subr.mxu0 0.0
    %61 = vmatpush1.xpose.msra.mxu0 0.0
    %62 = vmatprep.subr.mxu0 0.0
    %63 = vmatpush1.xpose.msra.mxu0 0.0
    %64 = vmatprep.subr.mxu0 0.0
    %65 = vmatpush1.xpose.msra.mxu0 0.0
    %66 = vmatprep.subr.mxu0 0.0
    %67 = vmatpush1.xpose.msra.mxu0 0.0
    %68 = vmatprep.subr.mxu0 0.0
    %69 = vmatpush1.xpose.msra.mxu0 0.0
    %70 = vmatprep.subr.mxu0 0.0
    %71 = vmatpush1.xpose.msra.mxu0 0.0
    %72 = vmatprep.subr.mxu0 0.0
    %73 = vmatpush1.xpose.msra.mxu0 0.0
    %74 = vmatprep.subr.mxu0 0.0
    %75 = vmatpush1.xpose.msra.mxu0 0.0
    %76 = vmatprep.subr.mxu0 0.0
    %77 = vmatpush1.xpose.msra.mxu0 0.0
    %78 = vmatprep.subr.mxu0 0.0
    %79 = vmatpush1.xpose.msra.mxu0 0.0
    %80 = vmatprep.subr.mxu0 0.0
    %81 = vmatpush1.xpose.msra.mxu0 0.0
    %82 = vmatprep.subr.mxu0 0.0
    %83 = vmatpush1.xpose.msra.mxu0 0.0
    %84 = vmatprep.subr.mxu0 0.0
    %85 = vmatpush1.xpose.msra.mxu0 0.0
    %86 = vmatprep.subr.mxu0 0.0
    %87 = vmatpush1.xpose.msra.mxu0 0.0
    %88 = vmatprep.subr.mxu0 0.0
    %89 = vmatpush1.xpose.msra.mxu0 0.0
    %90 = vmatprep.subr.mxu0 0.0
    %91 = vmatpush1.xpose.msra.mxu0 0.0
    %92 = vmatprep.subr.mxu0 0.0
    %93 = vmatpush1.xpose.msra.mxu0 0.0
    %94 = vmatprep.subr.mxu0 0.0
    %95 = vmatpush1.xpose.msra.mxu0 0.0
    %96 = vmatprep.subr.mxu0 0.0
    %97 = vmatpush1.xpose.msra.mxu0 0.0
    %98 = vmatprep.subr.mxu0 0.0
    %99 = vmatpush1.xpose.msra.mxu0 0.0
    %100 = vmatprep.subr.mxu0 0.0
    %101 = vmatpush1.xpose.msra.mxu0 0.0
    %102 = vmatprep.subr.mxu0 0.0
    %103 = vmatpush1.xpose.msra.mxu0 0.0
    %104 = vmatprep.subr.mxu0 0.0
    %105 = vmatpush1.xpose.msra.mxu0 0.0
    %106 = vmatprep.subr.mxu0 0.0
    %107 = vmatpush1.xpose.msra.mxu0 0.0
    %108 = vmatprep.subr.mxu0 0.0
    %109 = vmatpush1.xpose.msra.mxu0 0.0
    %110 = vmatprep.subr.mxu0 0.0
    %111 = vmatpush1.xpose.msra.mxu0 0.0
    %112 = vmatprep.subr.mxu0 0.0
    %113 = vmatpush1.xpose.msra.mxu0 0.0
    %114 = vmatprep.subr.mxu0 0.0
    %115 = vmatpush1.xpose.msra.mxu0 0.0
    %116 = vmatprep.subr.mxu0 0.0
    %117 = vmatpush1.xpose.msra.mxu0 0.0
    %118 = vmatprep.mubr.f32.mxu0 0.0
    %119 = vmatmul.mubr.f32.gmra.mrb[0].mxu0 %v46
    %v120 = vpop.f32.mrb[0].mxu0
    %v121 = vadd.f32 %v43, %v120
    %v122 = vpop.f32.mrb[0].mxu0
    %123 = vdwg.mxu0
    %vm124 = vcmask 122880
    %125 = vst.msk [vmem:[#allocation6] sm:$0x1] %vm124, %v121
    // Predicated region
    $region18: #{tpu_custom_call.1} parent=1 // pred_check
      _
    $region19: #{tpu_custom_call.1} parent=1 // pred_check_branch
      %127 = sbr.rel (0) target = $region21
    $region20: #{tpu_custom_call.1} parent=1 // pred_region
      %s129 = ssub.s32 16, 16
      %130 = vsyncadd [#allocation5], %s129
      %s132 = sshll.u32 [#allocation6], 4
      %s133 = int_to_ptr.vmem [resolvable:$true] %s132
      %135 = dma.vmem_to_hbm [thread:$0]  %s133, 16, %s3, [#allocation5]
    $region21: #{tpu_custom_call.1} parent=1 // pred_fallthru
      _
    // Predicated region
    $region22: #{tpu_custom_call.1} parent=1 // pred_check
      _
    $region23: #{tpu_custom_call.1} parent=1 // pred_check_branch
      %137 = sbr.rel (0) target = $region25
    $region24: #{tpu_custom_call.1} parent=1 // pred_region
      %138 = dma.done [#allocation5], 16
    $region25: #{tpu_custom_call.1} parent=1 // pred_fallthru
      _
    %139 = vsyncpa [#allocation4], 1
    %140 = vsyncpa [#allocation5], 1

</llo_original>
